<compile_context>
chip_gen: v7x
topology: tpu7x:2x2x1
jax: 0.10.0
libtpu: 0.0.40
codegen_flags: <defaults>
</compile_context>

<pallas_src>
import jax
import jax.numpy as jnp
import numpy as np
from jax.experimental import pallas as pl
from jax.experimental.pallas import tpu as pltpu

VOTER_CNT = 5
NUM_CLASSES = 2
HIDDEN = 32

H_ALL = ((VOTER_CNT * HIDDEN + 127) // 128) * 128     # 160 -> 256 (lane dense)
OUT_PAD = 128                                          # V*NC=10 -> 128 (lane dense)


def _round_up(n, m):
    return ((n + m - 1) // m) * m


def _batch_tile(b):
    """Rows per grid step: >=8 (sublane), up to 256 (MXU rows on v6e/v7x)."""
    if b <= 8:
        return 8
    if b <= 256:
        return _round_up(b, 16)
    return 256


def _voting_kernel(x_ref, w1_ref, b1_ref, w2_ref, b2_ref, out_ref):
    """One batch tile, all 5 voters fused.

      h      = relu(x @ W1_all + b1_all)          # [TB, H_ALL]   one bf16 MXU matmul
      logits = h @ W2_all(block-diag) + b2_all    # [TB, OUT_PAD] one bf16 MXU matmul
      p      = sigmoid(logits)                    # voter v's probs in lanes
                                                  #   [v*NC, (v+1)*NC)
    Unrolled online argmax over voters keeps, per (row, class), the probability
    of the voter with the highest confidence max(p, 1-p).  Result is stored as
    a lane-dense [TB, 128] slab (answer in lanes 0..1).
    """
    x = x_ref[...]                                                      # [TB, D] bf16
    h = jnp.dot(x, w1_ref[...], preferred_element_type=jnp.float32) + b1_ref[...]
    h = jnp.maximum(h, 0.0)                                             # ReLU (f32)
    logits = jnp.dot(h.astype(jnp.bfloat16), w2_ref[...],
                     preferred_element_type=jnp.float32) + b2_ref[...]
    p = jax.nn.sigmoid(logits)                                          # [TB, OUT_PAD] f32
    conf = jnp.maximum(p, 1.0 - p)                                      # torch.maximum(x, 1-x)

    # Voter 0 seeds the running best (no -inf init / extra selects).
    best_p = p[:, 0:NUM_CLASSES]
    best_conf = conf[:, 0:NUM_CLASSES]
    for v in range(1, VOTER_CNT):                                       # fully unrolled
        lo = v * NUM_CLASSES
        p_v = p[:, lo:lo + NUM_CLASSES]
        c_v = conf[:, lo:lo + NUM_CLASSES]
        # Strictly-greater keeps the first (lowest-index) voter on exact ties,
        # matching torch.max's returned index.
        hit = c_v > best_conf
        best_p = jnp.where(hit, p_v, best_p)
        best_conf = jnp.maximum(c_v, best_conf)

    # Lane-dense store: place the NUM_CLASSES result lanes into a full 128-lane
    # slab (unmasked vst); padded lanes are zero and never read by the wrapper.
    lane = jax.lax.broadcasted_iota(jnp.int32, p.shape, 1)
    out = jnp.zeros_like(p)
    for c in range(NUM_CLASSES):
        col = jnp.broadcast_to(best_p[:, c:c + 1], p.shape)
        out = jnp.where(lane == c, col, out)
    out_ref[...] = out.astype(out_ref.dtype)


def pack_voter_weights(w1, b1, w2, b2):
    """Pack per-voter MLP weights into fused, lane-dense slabs.

    Host-side numpy, intended to run ONCE at model-load time (hoisted out of
    the per-call forward path).  Returns bf16 weight slabs + f32 bias slabs.
    """
    w1 = np.asarray(w1, np.float32)
    b1 = np.asarray(b1, np.float32)
    w2 = np.asarray(w2, np.float32)
    b2 = np.asarray(b2, np.float32)
    V, D, Hh = w1.shape
    NC = w2.shape[-1]
    D_pad = _round_up(D, 128)                       # keep the MXU K dim clean

    # W1: [V, D, H] -> [D_pad, V*H] (column v*H + j == voter v, hidden j), padded.
    w1_all = np.zeros((D_pad, H_ALL), np.float32)
    w1_all[:D, : V * Hh] = np.transpose(w1, (1, 0, 2)).reshape(D, V * Hh)
    b1_all = np.zeros((1, H_ALL), np.float32)
    b1_all[:, : V * Hh] = b1.reshape(V * Hh)

    # W2: block-diagonal [H_ALL, OUT_PAD]; voter v occupies rows v*H:(v+1)*H and
    # columns v*NC:(v+1)*NC.  Padded rows/cols are zero (padded h is 0 anyway).
    w2_all = np.zeros((H_ALL, OUT_PAD), np.float32)
    b2_all = np.zeros((1, OUT_PAD), np.float32)
    for v in range(V):
        w2_all[v * Hh:(v + 1) * Hh, v * NC:(v + 1) * NC] = w2[v]
        b2_all[:, v * NC:(v + 1) * NC] = b2[v]

    return (jnp.asarray(w1_all, jnp.bfloat16), jnp.asarray(b1_all, jnp.float32),
            jnp.asarray(w2_all, jnp.bfloat16), jnp.asarray(b2_all, jnp.float32))


def voting_net_forward(x_nchw, packed):
    """x_nchw: [B, C, H, W]. packed: pack_voter_weights(...). Returns [B, NUM_CLASSES] f32."""
    w1_all, b1_all, w2_all, b2_all = packed
    B = x_nchw.shape[0]
    D = int(np.prod(x_nchw.shape[1:]))
    D_pad = w1_all.shape[0]

    x = x_nchw.reshape(B, D).astype(jnp.bfloat16)   # glue: NCHW flatten + bf16 cast
    if D_pad != D:
        x = jnp.pad(x, ((0, 0), (0, D_pad - D)))

    TB = _batch_tile(B)
    B_pad = _round_up(B, TB)
    if B_pad != B:
        x = jnp.pad(x, ((0, B_pad - B), (0, 0)))

    out = pl.pallas_call(
        _voting_kernel,
        out_shape=jax.ShapeDtypeStruct((B_pad, OUT_PAD), jnp.float32),
        grid=(B_pad // TB,),
        in_specs=[
            pl.BlockSpec((TB, D_pad), lambda i: (i, 0)),           # x (batch-tiled)
            # Weight/bias blocks: constant index_map -> VMEM-resident across
            # batch tiles (Pallas skips re-DMA when the block index repeats).
            # NOTE: pl.Buffered(1) would drop the redundant second buffer
            # (~0.6 MiB bf16) — negligible here, omitted.
            pl.BlockSpec((D_pad, H_ALL), lambda i: (0, 0)),        # fused W1 (bf16)
            pl.BlockSpec((1, H_ALL), lambda i: (0, 0)),            # fused b1 (f32)
            pl.BlockSpec((H_ALL, OUT_PAD), lambda i: (0, 0)),      # block-diag W2 (bf16)
            pl.BlockSpec((1, OUT_PAD), lambda i: (0, 0)),          # fused b2 (f32)
        ],
        out_specs=pl.BlockSpec((TB, OUT_PAD), lambda i: (i, 0)),   # lane-dense slab
        compiler_params=pltpu.CompilerParams(
            dimension_semantics=("parallel",)),                    # batch tiles -> both TCs
    )(x, w1_all, b1_all, w2_all, b2_all)

    return out[:B, :NUM_CLASSES]


def voting_net_reference(x_nchw, w1, b1, w2, b2, matmul_dtype=jnp.bfloat16):
    """Pure-JAX reference reproducing VotingNet.forward semantics.

    Matmul inputs are cast to `matmul_dtype` (f32 accumulation) to match the
    kernel's precision; elementwise math stays f32.
    """
    B = x_nchw.shape[0]
    x = x_nchw.reshape(B, -1)
    ys = []
    for v in range(VOTER_CNT):
        h = jnp.dot(x.astype(matmul_dtype), w1[v].astype(matmul_dtype),
                    preferred_element_type=jnp.float32) + b1[v]
        h = jnp.maximum(h, 0.0)
        logits = jnp.dot(h.astype(matmul_dtype), w2[v].astype(matmul_dtype),
                         preferred_element_type=jnp.float32) + b2[v]
        ys.append(jax.nn.sigmoid(logits)[:, None, :])               # net(x)[:, None, :]
    xs = jnp.concatenate(ys, axis=1)                                # [B, V, NC]
    conf = jnp.maximum(xs, 1.0 - xs)
    ix = jnp.argmax(conf, axis=1)                                   # first max on ties
    out = jnp.take_along_axis(xs, ix[:, None, :], axis=1)[:, 0, :]
    return out                                                      # == .view(-1, 2)


if __name__ == "__main__":
    B, C, H, W = 2, 4, 16, 16
    D = C * H * W

    key = jax.random.PRNGKey(0)
    kx, k1, k2, k3, k4 = jax.random.split(key, 5)
    x = jax.random.normal(kx, (B, C, H, W), dtype=jnp.float32)
    # Deterministic synthetic voter parameters (5 voters).
    w1 = jax.random.normal(k1, (VOTER_CNT, D, HIDDEN), dtype=jnp.float32) * 0.05
    b1 = jax.random.normal(k2, (VOTER_CNT, 1, HIDDEN), dtype=jnp.float32) * 0.05
    w2 = jax.random.normal(k3, (VOTER_CNT, HIDDEN, NUM_CLASSES), dtype=jnp.float32) * 0.3
    b2 = jax.random.normal(k4, (VOTER_CNT, 1, NUM_CLASSES), dtype=jnp.float32) * 0.3

    # Pack ONCE (model load time) — no per-call packing work.
    packed = pack_voter_weights(w1, b1, w2, b2)

    fwd = jax.jit(voting_net_forward)
    out = fwd(x, packed)
    jax.block_until_ready(out)

    ref = voting_net_reference(x, w1, b1, w2, b2)
    np.testing.assert_allclose(np.asarray(out), np.asarray(ref), rtol=2e-3, atol=2e-3)

    print("KERNEL_OK")
</pallas_src>

<mosaic_0001>
module attributes {stable_mosaic.version = 11 : i64} {
  func.func @_voting_kernel(%arg0: i32, %arg1: memref<8x1024xbf16, #tpu.memory_space<vmem>>, %arg2: memref<1024x256xbf16, #tpu.memory_space<vmem>>, %arg3: memref<1x256xf32, #tpu.memory_space<vmem>>, %arg4: memref<256x128xbf16, #tpu.memory_space<vmem>>, %arg5: memref<1x128xf32, #tpu.memory_space<vmem>>, %arg6: memref<8x128xf32, #tpu.memory_space<vmem>>) attributes {dimension_semantics = [#tpu.dimension_semantics<parallel>], iteration_bounds = array<i64: 1>, scalar_prefetch = 0 : i64, scratch_operands = 0 : i64, tpu.core_type = #tpu.core_type<tc>, window_params = [{transform_indices = @transform_0, window_bounds = array<i64: 8, 1024>}, {pipeline_mode = #tpu.pipeline_mode<synchronous>, transform_indices = @transform_1, window_bounds = array<i64: 1024, 256>}, {pipeline_mode = #tpu.pipeline_mode<synchronous>, transform_indices = @transform_2, window_bounds = array<i64: 1, 256>}, {pipeline_mode = #tpu.pipeline_mode<synchronous>, transform_indices = @transform_3, window_bounds = array<i64: 256, 128>}, {pipeline_mode = #tpu.pipeline_mode<synchronous>, transform_indices = @transform_4, window_bounds = array<i64: 1, 128>}, {transform_indices = @transform_5, window_bounds = array<i64: 8, 128>}]} {
    %c0 = arith.constant 0 : index
    %c0_0 = arith.constant 0 : index
    %0 = vector.load %arg1[%c0, %c0_0] : memref<8x1024xbf16, #tpu.memory_space<vmem>>, vector<8x1024xbf16>
    %c0_1 = arith.constant 0 : index
    %c0_2 = arith.constant 0 : index
    %1 = vector.load %arg2[%c0_1, %c0_2] : memref<1024x256xbf16, #tpu.memory_space<vmem>>, vector<1024x256xbf16>
    %cst = arith.constant dense<0.000000e+00> : vector<8x256xf32>
    %2 = tpu.matmul %0, %1, %cst {dimension_numbers = #tpu.dot_dimension_numbers<[1], [0], [0], [1], [0, 0, 1, 1], [], []>} : vector<8x1024xbf16>, vector<1024x256xbf16>, vector<8x256xf32> -> vector<8x256xf32>
    %c0_3 = arith.constant 0 : index
    %c0_4 = arith.constant 0 : index
    %3 = vector.load %arg3[%c0_3, %c0_4] : memref<1x256xf32, #tpu.memory_space<vmem>>, vector<1x256xf32>
    %4 = vector.broadcast %3 : vector<1x256xf32> to vector<8x256xf32>
    %5 = arith.addf %2, %4 : vector<8x256xf32>
    %cst_5 = arith.constant 0.000000e+00 : f32
    %6 = vector.broadcast %cst_5 : f32 to vector<8x256xf32>
    %7 = arith.maximumf %5, %6 : vector<8x256xf32>
    %8 = arith.truncf %7 : vector<8x256xf32> to vector<8x256xbf16>
    %c0_6 = arith.constant 0 : index
    %c0_7 = arith.constant 0 : index
    %9 = vector.load %arg4[%c0_6, %c0_7] : memref<256x128xbf16, #tpu.memory_space<vmem>>, vector<256x128xbf16>
    %cst_8 = arith.constant dense<0.000000e+00> : vector<8x128xf32>
    %10 = tpu.matmul %8, %9, %cst_8 {dimension_numbers = #tpu.dot_dimension_numbers<[1], [0], [0], [1], [0, 0, 1, 1], [], []>} : vector<8x256xbf16>, vector<256x128xbf16>, vector<8x128xf32> -> vector<8x128xf32>
    %c0_9 = arith.constant 0 : index
    %c0_10 = arith.constant 0 : index
    %11 = vector.load %arg5[%c0_9, %c0_10] : memref<1x128xf32, #tpu.memory_space<vmem>>, vector<1x128xf32>
    %12 = vector.broadcast %11 : vector<1x128xf32> to vector<8x128xf32>
    %13 = arith.addf %10, %12 : vector<8x128xf32>
    %14 = arith.negf %13 : vector<8x128xf32>
    %15 = math.exp %14 : vector<8x128xf32>
    %cst_11 = arith.constant 1.000000e+00 : f32
    %16 = vector.broadcast %cst_11 : f32 to vector<8x128xf32>
    %17 = arith.addf %16, %15 : vector<8x128xf32>
    %18 = arith.divf %16, %17 : vector<8x128xf32>
    %cst_12 = arith.constant 1.000000e+00 : f32
    %19 = vector.broadcast %cst_12 : f32 to vector<8x128xf32>
    %20 = arith.subf %19, %18 : vector<8x128xf32>
    %21 = arith.maximumf %18, %20 : vector<8x128xf32>
    %22 = vector.extract_strided_slice %18 {offsets = [0, 0], sizes = [8, 2], strides = [1, 1]} : vector<8x128xf32> to vector<8x2xf32>
    %23 = vector.extract_strided_slice %21 {offsets = [0, 0], sizes = [8, 2], strides = [1, 1]} : vector<8x128xf32> to vector<8x2xf32>
    %24 = vector.extract_strided_slice %18 {offsets = [0, 2], sizes = [8, 2], strides = [1, 1]} : vector<8x128xf32> to vector<8x2xf32>
    %25 = vector.extract_strided_slice %21 {offsets = [0, 2], sizes = [8, 2], strides = [1, 1]} : vector<8x128xf32> to vector<8x2xf32>
    %26 = arith.cmpf ogt, %25, %23 : vector<8x2xf32>
    %27 = arith.select %26, %24, %22 : vector<8x2xi1>, vector<8x2xf32>
    %28 = arith.maximumf %25, %23 : vector<8x2xf32>
    %29 = vector.extract_strided_slice %18 {offsets = [0, 4], sizes = [8, 2], strides = [1, 1]} : vector<8x128xf32> to vector<8x2xf32>
    %30 = vector.extract_strided_slice %21 {offsets = [0, 4], sizes = [8, 2], strides = [1, 1]} : vector<8x128xf32> to vector<8x2xf32>
    %31 = arith.cmpf ogt, %30, %28 : vector<8x2xf32>
    %32 = arith.select %31, %29, %27 : vector<8x2xi1>, vector<8x2xf32>
    %33 = arith.maximumf %30, %28 : vector<8x2xf32>
    %34 = vector.extract_strided_slice %18 {offsets = [0, 6], sizes = [8, 2], strides = [1, 1]} : vector<8x128xf32> to vector<8x2xf32>
    %35 = vector.extract_strided_slice %21 {offsets = [0, 6], sizes = [8, 2], strides = [1, 1]} : vector<8x128xf32> to vector<8x2xf32>
    %36 = arith.cmpf ogt, %35, %33 : vector<8x2xf32>
    %37 = arith.select %36, %34, %32 : vector<8x2xi1>, vector<8x2xf32>
    %38 = arith.maximumf %35, %33 : vector<8x2xf32>
    %39 = vector.extract_strided_slice %18 {offsets = [0, 8], sizes = [8, 2], strides = [1, 1]} : vector<8x128xf32> to vector<8x2xf32>
    %40 = vector.extract_strided_slice %21 {offsets = [0, 8], sizes = [8, 2], strides = [1, 1]} : vector<8x128xf32> to vector<8x2xf32>
    %41 = arith.cmpf ogt, %40, %38 : vector<8x2xf32>
    %42 = arith.select %41, %39, %37 : vector<8x2xi1>, vector<8x2xf32>
    %43 = tpu.iota {dimensions = array<i32: 1>} : vector<8x128xi32>
    %cst_13 = arith.constant 0.000000e+00 : f32
    %44 = vector.broadcast %cst_13 : f32 to vector<8x128xf32>
    %45 = vector.extract_strided_slice %42 {offsets = [0, 0], sizes = [8, 1], strides = [1, 1]} : vector<8x2xf32> to vector<8x1xf32>
    %46 = vector.shape_cast %45 : vector<8x1xf32> to vector<8x1xf32>
    %47 = vector.broadcast %46 : vector<8x1xf32> to vector<8x128xf32>
    %c0_i32 = arith.constant 0 : i32
    %48 = vector.broadcast %c0_i32 : i32 to vector<8x128xi32>
    %49 = arith.cmpi eq, %43, %48 : vector<8x128xi32>
    %50 = arith.select %49, %47, %44 : vector<8x128xi1>, vector<8x128xf32>
    %51 = vector.extract_strided_slice %42 {offsets = [0, 1], sizes = [8, 1], strides = [1, 1]} : vector<8x2xf32> to vector<8x1xf32>
    %52 = vector.shape_cast %51 : vector<8x1xf32> to vector<8x1xf32>
    %53 = vector.broadcast %52 : vector<8x1xf32> to vector<8x128xf32>
    %c1_i32 = arith.constant 1 : i32
    %54 = vector.broadcast %c1_i32 : i32 to vector<8x128xi32>
    %55 = arith.cmpi eq, %43, %54 : vector<8x128xi32>
    %56 = arith.select %55, %53, %50 : vector<8x128xi1>, vector<8x128xf32>
    %c0_14 = arith.constant 0 : index
    %c0_15 = arith.constant 0 : index
    %57 = vector.load %arg6[%c0_14, %c0_15] : memref<8x128xf32, #tpu.memory_space<vmem>>, vector<8x128xf32>
    tpu.vector_store %arg6[%c0_14, %c0_15], %56 {strides = array<i32>} : memref<8x128xf32, #tpu.memory_space<vmem>>, vector<8x128xf32>,
    return
  }
  func.func @transform_0(%arg0: i32) -> (i32, i32) {
    %c0_i32 = arith.constant 0 : i32
    %c0_i32_0 = arith.constant 0 : i32
    return %arg0, %c0_i32 : i32, i32
  }
  func.func @transform_1(%arg0: i32) -> (i32, i32) {
    %c0_i32 = arith.constant 0 : i32
    %c0_i32_0 = arith.constant 0 : i32
    %c0_i32_1 = arith.constant 0 : i32
    return %c0_i32, %c0_i32_0 : i32, i32
  }
  func.func @transform_2(%arg0: i32) -> (i32, i32) {
    %c0_i32 = arith.constant 0 : i32
    %c0_i32_0 = arith.constant 0 : i32
    %c0_i32_1 = arith.constant 0 : i32
    return %c0_i32, %c0_i32_0 : i32, i32
  }
  func.func @transform_3(%arg0: i32) -> (i32, i32) {
    %c0_i32 = arith.constant 0 : i32
    %c0_i32_0 = arith.constant 0 : i32
    %c0_i32_1 = arith.constant 0 : i32
    return %c0_i32, %c0_i32_0 : i32, i32
  }
  func.func @transform_4(%arg0: i32) -> (i32, i32) {
    %c0_i32 = arith.constant 0 : i32
    %c0_i32_0 = arith.constant 0 : i32
    %c0_i32_1 = arith.constant 0 : i32
    return %c0_i32, %c0_i32_0 : i32, i32
  }
  func.func @transform_5(%arg0: i32) -> (i32, i32) {
    %c0_i32 = arith.constant 0 : i32
    %c0_i32_0 = arith.constant 0 : i32
    return %arg0, %c0_i32 : i32, i32
  }
}

</mosaic_0001>

<llo_original>
// kernel: voting_net_forward.1
$region0: #{voting_net_forward.1}
  #allocation0 [shape = 'u32[]', space=smem, size = 0x4, offset = 0x4, fixed_abs, tag = 'smem constant byte address 0x4 - core index']
  #allocation1 [shape = 'u32[144,128]{1,0:T(1,128)}', space=vmem, size = 0x12000, scoped, tag = 'internal scratch']
  %s0 = inlined_call_operand.vmem [shape: bf16[8,1024], index: 0, kind: input, shape index: {}]
  %s1 = inlined_call_operand.hbm [shape: bf16[1024,256], index: 1, kind: input, shape index: {}]
  %s2 = inlined_call_operand.vmem [shape: f32[1,256], index: 2, kind: input, shape index: {}]
  %s3 = inlined_call_operand.vmem [shape: bf16[256,128], index: 3, kind: input, shape index: {}]
  %s4 = inlined_call_operand.vmem [shape: f32[1,128], index: 4, kind: input, shape index: {}]
  %s5 = inlined_call_operand.vmem [shape: f32[8,128], index: 5, kind: output, shape index: {}]
  %s6 = sld [smem:[#allocation0]]
  $region34: #{voting_net_forward.1} parent=0
    _
  %s8 = ssub.s32 1, %s6
  %s9 = scalar_select 0, %s8, %s6
  $region1: #{voting_net_forward.1} parent=0
    #allocation2 [shape = 'u8[524288]{0}', space=vmem, size = 0x80000, scoped, tag = 'input window, operand 1, single buffered']
    #allocation3 [shape = 's32[1]{0}', space=sflag, size = 0x4, scoped, tag = 'scoped memory for voting_net_forward.1']
    %10 = vsyncpa [#allocation3], 0
    // Predicated region
    $region2: #{voting_net_forward.1} parent=1 // pred_check
      _
    $region3: #{voting_net_forward.1} parent=1 // pred_check_branch
      %12 = sbr.rel (0) target = $region5
    $region4: #{voting_net_forward.1} parent=1 // pred_region
      _
    $region5: #{voting_net_forward.1} parent=1 // pred_fallthru
      _
    // Predicated region
    $region6: #{voting_net_forward.1} parent=1 // pred_check
      _
    $region7: #{voting_net_forward.1} parent=1 // pred_check_branch
      %14 = sbr.rel (0) target = $region9
    $region8: #{voting_net_forward.1} parent=1 // pred_region
      %s16 = ssub.s32 16384, 16384
      %17 = vsyncadd [#allocation3], %s16
      %s18 = sshll.u32 [#allocation2], 4
      %s19 = int_to_ptr.vmem [resolvable:$true] %s18
      %24 = dma.hbm_to_vmem [thread:$0]  %s1, 16384, %s19, [#allocation3], 128, 128, 8
    $region9: #{voting_net_forward.1} parent=1 // pred_fallthru
      _
    // Predicated region
    $region10: #{voting_net_forward.1} parent=1 // pred_check
      _
    $region11: #{voting_net_forward.1} parent=1 // pred_check_branch
      %26 = sbr.rel (0) target = $region13
    $region12: #{voting_net_forward.1} parent=1 // pred_region
      _
    $region13: #{voting_net_forward.1} parent=1 // pred_fallthru
      _
    // Predicated region
    $region14: #{voting_net_forward.1} parent=1 // pred_check
      _
    $region15: #{voting_net_forward.1} parent=1 // pred_check_branch
      %28 = sbr.rel (0) target = $region17
    $region16: #{voting_net_forward.1} parent=1 // pred_region
      _
    $region17: #{voting_net_forward.1} parent=1 // pred_fallthru
      _
    // Predicated region
    $region18: #{voting_net_forward.1} parent=1 // pred_check
      _
    $region19: #{voting_net_forward.1} parent=1 // pred_check_branch
      %30 = sbr.rel (0) target = $region21
    $region20: #{voting_net_forward.1} parent=1 // pred_region
      _
    $region21: #{voting_net_forward.1} parent=1 // pred_fallthru
      _
    // Predicated region
    $region22: #{voting_net_forward.1} parent=1 // pred_check
      _
    $region23: #{voting_net_forward.1} parent=1 // pred_check_branch
      %32 = sbr.rel (0) target = $region25
    $region24: #{voting_net_forward.1} parent=1 // pred_region
      %33 = dma.done [#allocation3], 16384
    $region25: #{voting_net_forward.1} parent=1 // pred_fallthru
      _
    %v35 = vld [vmem:[%s0] sm:$0xff]
    %v36 = vld [vmem:[%s0 + $0x8] sm:$0xff]
    %v37 = vld [vmem:[%s0 + $0x10] sm:$0xff]
    %v38 = vld [vmem:[%s0 + $0x18] sm:$0xff]
    %v39 = vld [vmem:[#allocation2] sm:$0xff]
    %v40 = vld [vmem:[#allocation2 + $0x8] sm:$0xff]
    %v41 = vld [vmem:[#allocation2 + $0x10] sm:$0xff]
    %v42 = vld [vmem:[#allocation2 + $0x18] sm:$0xff]
    %v43 = vld [vmem:[#allocation2 + $0x20] sm:$0xff]
    %v44 = vld [vmem:[#allocation2 + $0x28] sm:$0xff]
    %v45 = vld [vmem:[#allocation2 + $0x30] sm:$0xff]
    %v46 = vld [vmem:[#allocation2 + $0x38] sm:$0xff]
    %v47 = vld [vmem:[#allocation2 + $0x40] sm:$0xff]
    %v48 = vld [vmem:[#allocation2 + $0x48] sm:$0xff]
    %v49 = vld [vmem:[#allocation2 + $0x50] sm:$0xff]
    %v50 = vld [vmem:[#allocation2 + $0x58] sm:$0xff]
    %v51 = vld [vmem:[#allocation2 + $0x60] sm:$0xff]
    %v52 = vld [vmem:[#allocation2 + $0x68] sm:$0xff]
    %v53 = vld [vmem:[#allocation2 + $0x70] sm:$0xff]
    %v54 = vld [vmem:[#allocation2 + $0x78] sm:$0xff]
    %v55 = vld [vmem:[#allocation2 + $0x80] sm:$0xff]
    %v56 = vld [vmem:[#allocation2 + $0x88] sm:$0xff]
    %v57 = vld [vmem:[#allocation2 + $0x90] sm:$0xff]
    %v58 = vld [vmem:[#allocation2 + $0x98] sm:$0xff]
    %v59 = vld [vmem:[#allocation2 + $0xa0] sm:$0xff]
    %v60 = vld [vmem:[#allocation2 + $0xa8] sm:$0xff]
    %v61 = vld [vmem:[#allocation2 + $0xb0] sm:$0xff]
    %v62 = vld [vmem:[#allocation2 + $0xb8] sm:$0xff]
    %v63 = vld [vmem:[#allocation2 + $0xc0] sm:$0xff]
    %v64 = vld [vmem:[#allocation2 + $0xc8] sm:$0xff]
    %v65 = vld [vmem:[#allocation2 + $0xd0] sm:$0xff]
    %v66 = vld [vmem:[#allocation2 + $0xd8] sm:$0xff]
    %v67 = vld [vmem:[#allocation2 + $0xe0] sm:$0xff]
    %v68 = vld [vmem:[#allocation2 + $0xe8] sm:$0xff]
    %v69 = vld [vmem:[#allocation2 + $0xf0] sm:$0xff]
    %v70 = vld [vmem:[#allocation2 + $0xf8] sm:$0xff]
    %v71 = vld [vmem:[#allocation2 + $0x100] sm:$0xff]
    %v72 = vld [vmem:[#allocation2 + $0x108] sm:$0xff]
    %v73 = vld [vmem:[#allocation2 + $0x110] sm:$0xff]
    %v74 = vld [vmem:[#allocation2 + $0x118] sm:$0xff]
    %v75 = vld [vmem:[#allocation2 + $0x120] sm:$0xff]
    %v76 = vld [vmem:[#allocation2 + $0x128] sm:$0xff]
    %v77 = vld [vmem:[#allocation2 + $0x130] sm:$0xff]
    %v78 = vld [vmem:[#allocation2 + $0x138] sm:$0xff]
    %v79 = vld [vmem:[#allocation2 + $0x140] sm:$0xff]
    %v80 = vld [vmem:[#allocation2 + $0x148] sm:$0xff]
    %v81 = vld [vmem:[#allocation2 + $0x150] sm:$0xff]
    %v82 = vld [vmem:[#allocation2 + $0x158] sm:$0xff]
    %v83 = vld [vmem:[#allocation2 + $0x160] sm:$0xff]
    %v84 = vld [vmem:[#allocation2 + $0x168] sm:$0xff]
    %v85 = vld [vmem:[#allocation2 + $0x170] sm:$0xff]
    %v86 = vld [vmem:[#allocation2 + $0x178] sm:$0xff]
    %v87 = vld [vmem:[#allocation2 + $0x180] sm:$0xff]
    %v88 = vld [vmem:[#allocation2 + $0x188] sm:$0xff]
    %v89 = vld [vmem:[#allocation2 + $0x190] sm:$0xff]
    %v90 = vld [vmem:[#allocation2 + $0x198] sm:$0xff]
    %v91 = vld [vmem:[#allocation2 + $0x1a0] sm:$0xff]
    %v92 = vld [vmem:[#allocation2 + $0x1a8] sm:$0xff]
    %v93 = vld [vmem:[#allocation2 + $0x1b0] sm:$0xff]
    %v94 = vld [vmem:[#allocation2 + $0x1b8] sm:$0xff]
    %v95 = vld [vmem:[#allocation2 + $0x1c0] sm:$0xff]
    %v96 = vld [vmem:[#allocation2 + $0x1c8] sm:$0xff]
    %v97 = vld [vmem:[#allocation2 + $0x1d0] sm:$0xff]
    %v98 = vld [vmem:[#allocation2 + $0x1d8] sm:$0xff]
    %v99 = vld [vmem:[#allocation2 + $0x1e0] sm:$0xff]
    %v100 = vld [vmem:[#allocation2 + $0x1e8] sm:$0xff]
    %v101 = vld [vmem:[#allocation2 + $0x1f0] sm:$0xff]
    %v102 = vld [vmem:[#allocation2 + $0x1f8] sm:$0xff]
    %v103 = vld [vmem:[#allocation2 + $0x200] sm:$0xff]
    %v104 = vld [vmem:[#allocation2 + $0x208] sm:$0xff]
    %v105 = vld [vmem:[#allocation2 + $0x210] sm:$0xff]
    %v106 = vld [vmem:[#allocation2 + $0x218] sm:$0xff]
    %v107 = vld [vmem:[#allocation2 + $0x220] sm:$0xff]
    %v108 = vld [vmem:[#allocation2 + $0x228] sm:$0xff]
    %v109 = vld [vmem:[#allocation2 + $0x230] sm:$0xff]
    %v110 = vld [vmem:[#allocation2 + $0x238] sm:$0xff]
    %v111 = vld [vmem:[#allocation2 + $0x240] sm:$0xff]
    %v112 = vld [vmem:[#allocation2 + $0x248] sm:$0xff]
    %v113 = vld [vmem:[#allocation2 + $0x250] sm:$0xff]
    %v114 = vld [vmem:[#allocation2 + $0x258] sm:$0xff]
    %v115 = vld [vmem:[#allocation2 + $0x260] sm:$0xff]
    %v116 = vld [vmem:[#allocation2 + $0x268] sm:$0xff]
    %v117 = vld [vmem:[#allocation2 + $0x270] sm:$0xff]
    %v118 = vld [vmem:[#allocation2 + $0x278] sm:$0xff]
    %v119 = vld [vmem:[#allocation2 + $0x280] sm:$0xff]
    %v120 = vld [vmem:[#allocation2 + $0x288] sm:$0xff]
    %v121 = vld [vmem:[#allocation2 + $0x290] sm:$0xff]
    %v122 = vld [vmem:[#allocation2 + $0x298] sm:$0xff]
    %v123 = vld [vmem:[#allocation2 + $0x2a0] sm:$0xff]
    %v124 = vld [vmem:[#allocation2 + $0x2a8] sm:$0xff]
    %v125 = vld [vmem:[#allocation2 + $0x2b0] sm:$0xff]
    %v126 = vld [vmem:[#allocation2 + $0x2b8] sm:$0xff]
    %v127 = vld [vmem:[#allocation2 + $0x2c0] sm:$0xff]
    %v128 = vld [vmem:[#allocation2 + $0x2c8] sm:$0xff]
    %v129 = vld [vmem:[#allocation2 + $0x2d0] sm:$0xff]
    %v130 = vld [vmem:[#allocation2 + $0x2d8] sm:$0xff]
    %v131 = vld [vmem:[#allocation2 + $0x2e0] sm:$0xff]
    %v132 = vld [vmem:[#allocation2 + $0x2e8] sm:$0xff]
    %v133 = vld [vmem:[#allocation2 + $0x2f0] sm:$0xff]
    %v134 = vld [vmem:[#allocation2 + $0x2f8] sm:$0xff]
    %v135 = vld [vmem:[#allocation2 + $0x300] sm:$0xff]
    %v136 = vld [vmem:[#allocation2 + $0x308] sm:$0xff]
    %v137 = vld [vmem:[#allocation2 + $0x310] sm:$0xff]
    %v138 = vld [vmem:[#allocation2 + $0x318] sm:$0xff]
    %v139 = vld [vmem:[#allocation2 + $0x320] sm:$0xff]
    %v140 = vld [vmem:[#allocation2 + $0x328] sm:$0xff]
    %v141 = vld [vmem:[#allocation2 + $0x330] sm:$0xff]
    %v142 = vld [vmem:[#allocation2 + $0x338] sm:$0xff]
    %v143 = vld [vmem:[#allocation2 + $0x340] sm:$0xff]
    %v144 = vld [vmem:[#allocation2 + $0x348] sm:$0xff]
    %v145 = vld [vmem:[#allocation2 + $0x350] sm:$0xff]
    %v146 = vld [vmem:[#allocation2 + $0x358] sm:$0xff]
    %v147 = vld [vmem:[#allocation2 + $0x360] sm:$0xff]
    %v148 = vld [vmem:[#allocation2 + $0x368] sm:$0xff]
    %v149 = vld [vmem:[#allocation2 + $0x370] sm:$0xff]
    %v150 = vld [vmem:[#allocation2 + $0x378] sm:$0xff]
    %v151 = vld [vmem:[#allocation2 + $0x380] sm:$0xff]
    %v152 = vld [vmem:[#allocation2 + $0x388] sm:$0xff]
    %v153 = vld [vmem:[#allocation2 + $0x390] sm:$0xff]
    %v154 = vld [vmem:[#allocation2 + $0x398] sm:$0xff]
    %v155 = vld [vmem:[#allocation2 + $0x3a0] sm:$0xff]
    %v156 = vld [vmem:[#allocation2 + $0x3a8] sm:$0xff]
    %v157 = vld [vmem:[#allocation2 + $0x3b0] sm:$0xff]
    %v158 = vld [vmem:[#allocation2 + $0x3b8] sm:$0xff]
    %v159 = vld [vmem:[#allocation2 + $0x3c0] sm:$0xff]
    %v160 = vld [vmem:[#allocation2 + $0x3c8] sm:$0xff]
    %v161 = vld [vmem:[#allocation2 + $0x3d0] sm:$0xff]
    %v162 = vld [vmem:[#allocation2 + $0x3d8] sm:$0xff]
    %v163 = vld [vmem:[#allocation2 + $0x3e0] sm:$0xff]
    %v164 = vld [vmem:[#allocation2 + $0x3e8] sm:$0xff]
    %v165 = vld [vmem:[#allocation2 + $0x3f0] sm:$0xff]
    %v166 = vld [vmem:[#allocation2 + $0x3f8] sm:$0xff]
    %v167 = vld [vmem:[%s2] sm:$0x3]
    %v169 = vlaneseq
    %v170 = vshrl.u32 %v169, 7
    %v171 = vsub.s32 0, %v170
    %v172 = vrot.slane %v167, %v171
    %v173 = vlaneseq
    %v174 = vshrl.u32 %v173, 7
    %v175 = vsub.s32 1, %v174
    %v176 = vrot.slane %v167, %v175
    %v183 = vunpack.c.l.b16 %v35
    %v184 = vunpack.c.h.b16 %v35
    %v185 = vunpack.c.l.b16 %v36
    %v186 = vunpack.c.h.b16 %v36
    %v187 = vunpack.c.l.b16 %v37
    %v188 = vunpack.c.h.b16 %v37
    %v189 = vunpack.c.l.b16 %v38
    %v190 = vunpack.c.h.b16 %v38
    %v191 = vpack.c.b16 %v183, %v183
    %v192 = vpack.c.b16 %v184, %v184
    %v193 = vpack.c.b16 %v185, %v185
    %v194 = vpack.c.b16 %v186, %v186
    %v195 = vpack.c.b16 %v187, %v187
    %v196 = vpack.c.b16 %v188, %v188
    %v197 = vpack.c.b16 %v189, %v189
    %v198 = vpack.c.b16 %v190, %v190
    %v335 = vunpack.c.l.b16 %v39
    %v336 = vunpack.c.h.b16 %v39
    %v337 = vunpack.c.l.b16 %v40
    %v338 = vunpack.c.h.b16 %v40
    %v339 = vunpack.c.l.b16 %v41
    %v340 = vunpack.c.h.b16 %v41
    %v341 = vunpack.c.l.b16 %v42
    %v342 = vunpack.c.h.b16 %v42
    %v343 = vunpack.c.l.b16 %v43
    %v344 = vunpack.c.h.b16 %v43
    %v345 = vunpack.c.l.b16 %v44
    %v346 = vunpack.c.h.b16 %v44
    %v347 = vunpack.c.l.b16 %v45
    %v348 = vunpack.c.h.b16 %v45
    %v349 = vunpack.c.l.b16 %v46
    %v350 = vunpack.c.h.b16 %v46
    %v351 = vunpack.c.l.b16 %v47
    %v352 = vunpack.c.h.b16 %v47
    %v353 = vunpack.c.l.b16 %v48
    %v354 = vunpack.c.h.b16 %v48
    %v355 = vunpack.c.l.b16 %v49
    %v356 = vunpack.c.h.b16 %v49
    %v357 = vunpack.c.l.b16 %v50
    %v358 = vunpack.c.h.b16 %v50
    %v359 = vunpack.c.l.b16 %v51
    %v360 = vunpack.c.h.b16 %v51
    %v361 = vunpack.c.l.b16 %v52
    %v362 = vunpack.c.h.b16 %v52
    %v363 = vunpack.c.l.b16 %v53
    %v364 = vunpack.c.h.b16 %v53
    %v365 = vunpack.c.l.b16 %v54
    %v366 = vunpack.c.h.b16 %v54
    %v367 = vunpack.c.l.b16 %v55
    %v368 = vunpack.c.h.b16 %v55
    %v369 = vunpack.c.l.b16 %v56
    %v370 = vunpack.c.h.b16 %v56
    %v371 = vunpack.c.l.b16 %v57
    %v372 = vunpack.c.h.b16 %v57
    %v373 = vunpack.c.l.b16 %v58
    %v374 = vunpack.c.h.b16 %v58
    %v375 = vunpack.c.l.b16 %v59
    %v376 = vunpack.c.h.b16 %v59
    %v377 = vunpack.c.l.b16 %v60
    %v378 = vunpack.c.h.b16 %v60
    %v379 = vunpack.c.l.b16 %v61
    %v380 = vunpack.c.h.b16 %v61
    %v381 = vunpack.c.l.b16 %v62
    %v382 = vunpack.c.h.b16 %v62
    %v383 = vunpack.c.l.b16 %v63
    %v384 = vunpack.c.h.b16 %v63
    %v385 = vunpack.c.l.b16 %v64
    %v386 = vunpack.c.h.b16 %v64
    %v387 = vunpack.c.l.b16 %v65
    %v388 = vunpack.c.h.b16 %v65
    %v389 = vunpack.c.l.b16 %v66
    %v390 = vunpack.c.h.b16 %v66
    %v391 = vunpack.c.l.b16 %v67
    %v392 = vunpack.c.h.b16 %v67
    %v393 = vunpack.c.l.b16 %v68
    %v394 = vunpack.c.h.b16 %v68
    %v395 = vunpack.c.l.b16 %v69
    %v396 = vunpack.c.h.b16 %v69
    %v397 = vunpack.c.l.b16 %v70
    %v398 = vunpack.c.h.b16 %v70
    %v399 = vunpack.c.l.b16 %v71
    %v400 = vunpack.c.h.b16 %v71
    %v401 = vunpack.c.l.b16 %v72
    %v402 = vunpack.c.h.b16 %v72
    %v403 = vunpack.c.l.b16 %v73
    %v404 = vunpack.c.h.b16 %v73
    %v405 = vunpack.c.l.b16 %v74
    %v406 = vunpack.c.h.b16 %v74
    %v407 = vunpack.c.l.b16 %v75
    %v408 = vunpack.c.h.b16 %v75
    %v409 = vunpack.c.l.b16 %v76
    %v410 = vunpack.c.h.b16 %v76
    %v411 = vunpack.c.l.b16 %v77
    %v412 = vunpack.c.h.b16 %v77
    %v413 = vunpack.c.l.b16 %v78
    %v414 = vunpack.c.h.b16 %v78
    %v415 = vunpack.c.l.b16 %v79
    %v416 = vunpack.c.h.b16 %v79
    %v417 = vunpack.c.l.b16 %v80
    %v418 = vunpack.c.h.b16 %v80
    %v419 = vunpack.c.l.b16 %v81
    %v420 = vunpack.c.h.b16 %v81
    %v421 = vunpack.c.l.b16 %v82
    %v422 = vunpack.c.h.b16 %v82
    %v423 = vunpack.c.l.b16 %v83
    %v424 = vunpack.c.h.b16 %v83
    %v425 = vunpack.c.l.b16 %v84
    %v426 = vunpack.c.h.b16 %v84
    %v427 = vunpack.c.l.b16 %v85
    %v428 = vunpack.c.h.b16 %v85
    %v429 = vunpack.c.l.b16 %v86
    %v430 = vunpack.c.h.b16 %v86
    %v431 = vunpack.c.l.b16 %v87
    %v432 = vunpack.c.h.b16 %v87
    %v433 = vunpack.c.l.b16 %v88
    %v434 = vunpack.c.h.b16 %v88
    %v435 = vunpack.c.l.b16 %v89
    %v436 = vunpack.c.h.b16 %v89
    %v437 = vunpack.c.l.b16 %v90
    %v438 = vunpack.c.h.b16 %v90
    %v439 = vunpack.c.l.b16 %v91
    %v440 = vunpack.c.h.b16 %v91
    %v441 = vunpack.c.l.b16 %v92
    %v442 = vunpack.c.h.b16 %v92
    %v443 = vunpack.c.l.b16 %v93
    %v444 = vunpack.c.h.b16 %v93
    %v445 = vunpack.c.l.b16 %v94
    %v446 = vunpack.c.h.b16 %v94
    %v447 = vunpack.c.l.b16 %v95
    %v448 = vunpack.c.h.b16 %v95
    %v449 = vunpack.c.l.b16 %v96
    %v450 = vunpack.c.h.b16 %v96
    %v451 = vunpack.c.l.b16 %v97
    %v452 = vunpack.c.h.b16 %v97
    %v453 = vunpack.c.l.b16 %v98
    %v454 = vunpack.c.h.b16 %v98
    %v455 = vunpack.c.l.b16 %v99
    %v456 = vunpack.c.h.b16 %v99
    %v457 = vunpack.c.l.b16 %v100
    %v458 = vunpack.c.h.b16 %v100
    %v459 = vunpack.c.l.b16 %v101
    %v460 = vunpack.c.h.b16 %v101
    %v461 = vunpack.c.l.b16 %v102
    %v462 = vunpack.c.h.b16 %v102
    %v463 = vunpack.c.l.b16 %v103
    %v464 = vunpack.c.h.b16 %v103
    %v465 = vunpack.c.l.b16 %v104
    %v466 = vunpack.c.h.b16 %v104
    %v467 = vunpack.c.l.b16 %v105
    %v468 = vunpack.c.h.b16 %v105
    %v469 = vunpack.c.l.b16 %v106
    %v470 = vunpack.c.h.b16 %v106
    %v471 = vunpack.c.l.b16 %v107
    %v472 = vunpack.c.h.b16 %v107
    %v473 = vunpack.c.l.b16 %v108
    %v474 = vunpack.c.h.b16 %v108
    %v475 = vunpack.c.l.b16 %v109
    %v476 = vunpack.c.h.b16 %v109
    %v477 = vunpack.c.l.b16 %v110
    %v478 = vunpack.c.h.b16 %v110
    %v479 = vunpack.c.l.b16 %v111
    %v480 = vunpack.c.h.b16 %v111
    %v481 = vunpack.c.l.b16 %v112
    %v482 = vunpack.c.h.b16 %v112
    %v483 = vunpack.c.l.b16 %v113
    %v484 = vunpack.c.h.b16 %v113
    %v485 = vunpack.c.l.b16 %v114
    %v486 = vunpack.c.h.b16 %v114
    %v487 = vunpack.c.l.b16 %v115
    %v488 = vunpack.c.h.b16 %v115
    %v489 = vunpack.c.l.b16 %v116
    %v490 = vunpack.c.h.b16 %v116
    %v491 = vunpack.c.l.b16 %v117
    %v492 = vunpack.c.h.b16 %v117
    %v493 = vunpack.c.l.b16 %v118
    %v494 = vunpack.c.h.b16 %v118
    %v495 = vunpack.c.l.b16 %v119
    %v496 = vunpack.c.h.b16 %v119
    %v497 = vunpack.c.l.b16 %v120
    %v498 = vunpack.c.h.b16 %v120
    %v499 = vunpack.c.l.b16 %v121
    %v500 = vunpack.c.h.b16 %v121
    %v501 = vunpack.c.l.b16 %v122
    %v502 = vunpack.c.h.b16 %v122
    %v503 = vunpack.c.l.b16 %v123
    %v504 = vunpack.c.h.b16 %v123
    %v505 = vunpack.c.l.b16 %v124
    %v506 = vunpack.c.h.b16 %v124
    %v507 = vunpack.c.l.b16 %v125
    %v508 = vunpack.c.h.b16 %v125
    %v509 = vunpack.c.l.b16 %v126
    %v510 = vunpack.c.h.b16 %v126
    %v511 = vunpack.c.l.b16 %v127
    %v512 = vunpack.c.h.b16 %v127
    %v513 = vunpack.c.l.b16 %v128
    %v514 = vunpack.c.h.b16 %v128
    %v515 = vunpack.c.l.b16 %v129
    %v516 = vunpack.c.h.b16 %v129
    %v517 = vunpack.c.l.b16 %v130
    %v518 = vunpack.c.h.b16 %v130
    %v519 = vunpack.c.l.b16 %v131
    %v520 = vunpack.c.h.b16 %v131
    %v521 = vunpack.c.l.b16 %v132
    %v522 = vunpack.c.h.b16 %v132
    %v523 = vunpack.c.l.b16 %v133
    %v524 = vunpack.c.h.b16 %v133
    %v525 = vunpack.c.l.b16 %v134
    %v526 = vunpack.c.h.b16 %v134
    %v527 = vunpack.c.l.b16 %v135
    %v528 = vunpack.c.h.b16 %v135
    %v529 = vunpack.c.l.b16 %v136
    %v530 = vunpack.c.h.b16 %v136
    %v531 = vunpack.c.l.b16 %v137
    %v532 = vunpack.c.h.b16 %v137
    %v533 = vunpack.c.l.b16 %v138
    %v534 = vunpack.c.h.b16 %v138
    %v535 = vunpack.c.l.b16 %v139
    %v536 = vunpack.c.h.b16 %v139
    %v537 = vunpack.c.l.b16 %v140
    %v538 = vunpack.c.h.b16 %v140
    %v539 = vunpack.c.l.b16 %v141
    %v540 = vunpack.c.h.b16 %v141
    %v541 = vunpack.c.l.b16 %v142
    %v542 = vunpack.c.h.b16 %v142
    %v543 = vunpack.c.l.b16 %v143
    %v544 = vunpack.c.h.b16 %v143
    %v545 = vunpack.c.l.b16 %v144
    %v546 = vunpack.c.h.b16 %v144
    %v547 = vunpack.c.l.b16 %v145
    %v548 = vunpack.c.h.b16 %v145
    %v549 = vunpack.c.l.b16 %v146
    %v550 = vunpack.c.h.b16 %v146
    %v551 = vunpack.c.l.b16 %v147
    %v552 = vunpack.c.h.b16 %v147
    %v553 = vunpack.c.l.b16 %v148
    %v554 = vunpack.c.h.b16 %v148
    %v555 = vunpack.c.l.b16 %v149
    %v556 = vunpack.c.h.b16 %v149
    %v557 = vunpack.c.l.b16 %v150
    %v558 = vunpack.c.h.b16 %v150
    %v559 = vunpack.c.l.b16 %v151
    %v560 = vunpack.c.h.b16 %v151
    %v561 = vunpack.c.l.b16 %v152
    %v562 = vunpack.c.h.b16 %v152
    %v563 = vunpack.c.l.b16 %v153
    %v564 = vunpack.c.h.b16 %v153
    %v565 = vunpack.c.l.b16 %v154
    %v566 = vunpack.c.h.b16 %v154
    %v567 = vunpack.c.l.b16 %v155
    %v568 = vunpack.c.h.b16 %v155
    %v569 = vunpack.c.l.b16 %v156
    %v570 = vunpack.c.h.b16 %v156
    %v571 = vunpack.c.l.b16 %v157
    %v572 = vunpack.c.h.b16 %v157
    %v573 = vunpack.c.l.b16 %v158
    %v574 = vunpack.c.h.b16 %v158
    %v575 = vunpack.c.l.b16 %v159
    %v576 = vunpack.c.h.b16 %v159
    %v577 = vunpack.c.l.b16 %v160
    %v578 = vunpack.c.h.b16 %v160
    %v579 = vunpack.c.l.b16 %v161
    %v580 = vunpack.c.h.b16 %v161
    %v581 = vunpack.c.l.b16 %v162
    %v582 = vunpack.c.h.b16 %v162
    %v583 = vunpack.c.l.b16 %v163
    %v584 = vunpack.c.h.b16 %v163
    %v585 = vunpack.c.l.b16 %v164
    %v586 = vunpack.c.h.b16 %v164
    %v587 = vunpack.c.l.b16 %v165
    %v588 = vunpack.c.h.b16 %v165
    %v589 = vunpack.c.l.b16 %v166
    %v590 = vunpack.c.h.b16 %v166
    %v591 = vpack.c.b16 %v337, %v335
    %v592 = vpack.c.b16 %v338, %v336
    %v593 = vpack.c.b16 %v341, %v339
    %v594 = vpack.c.b16 %v342, %v340
    %v595 = vpack.c.b16 %v345, %v343
    %v596 = vpack.c.b16 %v346, %v344
    %v597 = vpack.c.b16 %v349, %v347
    %v598 = vpack.c.b16 %v350, %v348
    %v599 = vpack.c.b16 %v353, %v351
    %v600 = vpack.c.b16 %v354, %v352
    %v601 = vpack.c.b16 %v357, %v355
    %v602 = vpack.c.b16 %v358, %v356
    %v603 = vpack.c.b16 %v361, %v359
    %v604 = vpack.c.b16 %v362, %v360
    %v605 = vpack.c.b16 %v365, %v363
    %v606 = vpack.c.b16 %v366, %v364
    %v607 = vpack.c.b16 %v369, %v367
    %v608 = vpack.c.b16 %v370, %v368
    %v609 = vpack.c.b16 %v373, %v371
    %v610 = vpack.c.b16 %v374, %v372
    %v611 = vpack.c.b16 %v377, %v375
    %v612 = vpack.c.b16 %v378, %v376
    %v613 = vpack.c.b16 %v381, %v379
    %v614 = vpack.c.b16 %v382, %v380
    %v615 = vpack.c.b16 %v385, %v383
    %v616 = vpack.c.b16 %v386, %v384
    %v617 = vpack.c.b16 %v389, %v387
    %v618 = vpack.c.b16 %v390, %v388
    %v619 = vpack.c.b16 %v393, %v391
    %v620 = vpack.c.b16 %v394, %v392
    %v621 = vpack.c.b16 %v397, %v395
    %v622 = vpack.c.b16 %v398, %v396
    %v623 = vpack.c.b16 %v401, %v399
    %v624 = vpack.c.b16 %v402, %v400
    %v625 = vpack.c.b16 %v405, %v403
    %v626 = vpack.c.b16 %v406, %v404
    %v627 = vpack.c.b16 %v409, %v407
    %v628 = vpack.c.b16 %v410, %v408
    %v629 = vpack.c.b16 %v413, %v411
    %v630 = vpack.c.b16 %v414, %v412
    %v631 = vpack.c.b16 %v417, %v415
    %v632 = vpack.c.b16 %v418, %v416
    %v633 = vpack.c.b16 %v421, %v419
    %v634 = vpack.c.b16 %v422, %v420
    %v635 = vpack.c.b16 %v425, %v423
    %v636 = vpack.c.b16 %v426, %v424
    %v637 = vpack.c.b16 %v429, %v427
    %v638 = vpack.c.b16 %v430, %v428
    %v639 = vpack.c.b16 %v433, %v431
    %v640 = vpack.c.b16 %v434, %v432
    %v641 = vpack.c.b16 %v437, %v435
    %v642 = vpack.c.b16 %v438, %v436
    %v643 = vpack.c.b16 %v441, %v439
    %v644 = vpack.c.b16 %v442, %v440
    %v645 = vpack.c.b16 %v445, %v443
    %v646 = vpack.c.b16 %v446, %v444
    %v647 = vpack.c.b16 %v449, %v447
    %v648 = vpack.c.b16 %v450, %v448
    %v649 = vpack.c.b16 %v453, %v451
    %v650 = vpack.c.b16 %v454, %v452
    %v651 = vpack.c.b16 %v457, %v455
    %v652 = vpack.c.b16 %v458, %v456
    %v653 = vpack.c.b16 %v461, %v459
    %v654 = vpack.c.b16 %v462, %v460
    %v655 = vpack.c.b16 %v465, %v463
    %v656 = vpack.c.b16 %v466, %v464
    %v657 = vpack.c.b16 %v469, %v467
    %v658 = vpack.c.b16 %v470, %v468
    %v659 = vpack.c.b16 %v473, %v471
    %v660 = vpack.c.b16 %v474, %v472
    %v661 = vpack.c.b16 %v477, %v475
    %v662 = vpack.c.b16 %v478, %v476
    %v663 = vpack.c.b16 %v481, %v479
    %v664 = vpack.c.b16 %v482, %v480
    %v665 = vpack.c.b16 %v485, %v483
    %v666 = vpack.c.b16 %v486, %v484
    %v667 = vpack.c.b16 %v489, %v487
    %v668 = vpack.c.b16 %v490, %v488
    %v669 = vpack.c.b16 %v493, %v491
    %v670 = vpack.c.b16 %v494, %v492
    %v671 = vpack.c.b16 %v497, %v495
    %v672 = vpack.c.b16 %v498, %v496
    %v673 = vpack.c.b16 %v501, %v499
    %v674 = vpack.c.b16 %v502, %v500
    %v675 = vpack.c.b16 %v505, %v503
    %v676 = vpack.c.b16 %v506, %v504
    %v677 = vpack.c.b16 %v509, %v507
    %v678 = vpack.c.b16 %v510, %v508
    %v679 = vpack.c.b16 %v513, %v511
    %v680 = vpack.c.b16 %v514, %v512
    %v681 = vpack.c.b16 %v517, %v515
    %v682 = vpack.c.b16 %v518, %v516
    %v683 = vpack.c.b16 %v521, %v519
    %v684 = vpack.c.b16 %v522, %v520
    %v685 = vpack.c.b16 %v525, %v523
    %v686 = vpack.c.b16 %v526, %v524
    %v687 = vpack.c.b16 %v529, %v527
    %v688 = vpack.c.b16 %v530, %v528
    %v689 = vpack.c.b16 %v533, %v531
    %v690 = vpack.c.b16 %v534, %v532
    %v691 = vpack.c.b16 %v537, %v535
    %v692 = vpack.c.b16 %v538, %v536
    %v693 = vpack.c.b16 %v541, %v539
    %v694 = vpack.c.b16 %v542, %v540
    %v695 = vpack.c.b16 %v545, %v543
    %v696 = vpack.c.b16 %v546, %v544
    %v697 = vpack.c.b16 %v549, %v547
    %v698 = vpack.c.b16 %v550, %v548
    %v699 = vpack.c.b16 %v553, %v551
    %v700 = vpack.c.b16 %v554, %v552
    %v701 = vpack.c.b16 %v557, %v555
    %v702 = vpack.c.b16 %v558, %v556
    %v703 = vpack.c.b16 %v561, %v559
    %v704 = vpack.c.b16 %v562, %v560
    %v705 = vpack.c.b16 %v565, %v563
    %v706 = vpack.c.b16 %v566, %v564
    %v707 = vpack.c.b16 %v569, %v567
    %v708 = vpack.c.b16 %v570, %v568
    %v709 = vpack.c.b16 %v573, %v571
    %v710 = vpack.c.b16 %v574, %v572
    %v711 = vpack.c.b16 %v577, %v575
    %v712 = vpack.c.b16 %v578, %v576
    %v713 = vpack.c.b16 %v581, %v579
    %v714 = vpack.c.b16 %v582, %v580
    %v715 = vpack.c.b16 %v585, %v583
    %v716 = vpack.c.b16 %v586, %v584
    %v717 = vpack.c.b16 %v589, %v587
    %v718 = vpack.c.b16 %v590, %v588
    %847 = vmatprep.subr.bf16.mxu0 %v592
    %848 = vmatpush1.bf16.msra.mxu0 %v591
    %849 = vmatprep.subr.bf16.mxu0 %v594
    %850 = vmatpush1.bf16.msra.mxu0 %v593
    %851 = vmatprep.subr.bf16.mxu0 %v596
    %852 = vmatpush1.bf16.msra.mxu0 %v595
    %853 = vmatprep.subr.bf16.mxu0 %v598
    %854 = vmatpush1.bf16.msra.mxu0 %v597
    %855 = vmatprep.subr.bf16.mxu0 %v600
    %856 = vmatpush1.bf16.msra.mxu0 %v599
    %857 = vmatprep.subr.bf16.mxu0 %v602
    %858 = vmatpush1.bf16.msra.mxu0 %v601
    %859 = vmatprep.subr.bf16.mxu0 %v604
    %860 = vmatpush1.bf16.msra.mxu0 %v603
    %861 = vmatprep.subr.bf16.mxu0 %v606
    %862 = vmatpush1.bf16.msra.mxu0 %v605
    %863 = vmatprep.subr.bf16.mxu0 %v608
    %864 = vmatpush1.bf16.msra.mxu0 %v607
    %865 = vmatprep.subr.bf16.mxu0 %v610
    %866 = vmatpush1.bf16.msra.mxu0 %v609
    %867 = vmatprep.subr.bf16.mxu0 %v612
    %868 = vmatpush1.bf16.msra.mxu0 %v611
    %869 = vmatprep.subr.bf16.mxu0 %v614
    %870 = vmatpush1.bf16.msra.mxu0 %v613
    %871 = vmatprep.subr.bf16.mxu0 %v616
    %872 = vmatpush1.bf16.msra.mxu0 %v615
    %873 = vmatprep.subr.bf16.mxu0 %v618
    %874 = vmatpush1.bf16.msra.mxu0 %v617
    %875 = vmatprep.subr.bf16.mxu0 %v620
    %876 = vmatpush1.bf16.msra.mxu0 %v619
    %877 = vmatprep.subr.bf16.mxu0 %v622
    %878 = vmatpush1.bf16.msra.mxu0 %v621
    %879 = vmatprep.mubr.bf16.mxu0 %v192
    %880 = vmatmul.mubr.bf16.gmra.mrb[0].mxu0 %v191
    %v881 = vpop.f32.mrb[0].mxu0
    %v882 = vadd.f32 %v172, %v881
    %v883 = vpop.f32.mrb[0].mxu0
    %v884 = vadd.f32 %v176, %v883
    %v885 = vpop.f32.mrb[0].mxu0
    %v886 = vpop.f32.mrb[0].mxu0
    %887 = vdwg.mxu0
    %888 = vmatprep.subr.bf16.mxu0 %v624
    %889 = vmatpush1.bf16.msra.mxu0 %v623
    %890 = vmatprep.subr.bf16.mxu0 %v626
    %891 = vmatpush1.bf16.msra.mxu0 %v625
    %892 = vmatprep.subr.bf16.mxu0 %v628
    %893 = vmatpush1.bf16.msra.mxu0 %v627
    %894 = vmatprep.subr.bf16.mxu0 %v630
    %895 = vmatpush1.bf16.msra.mxu0 %v629
    %896 = vmatprep.subr.bf16.mxu0 %v632
    %897 = vmatpush1.bf16.msra.mxu0 %v631
    %898 = vmatprep.subr.bf16.mxu0 %v634
    %899 = vmatpush1.bf16.msra.mxu0 %v633
    %900 = vmatprep.subr.bf16.mxu0 %v636
    %901 = vmatpush1.bf16.msra.mxu0 %v635
    %902 = vmatprep.subr.bf16.mxu0 %v638
    %903 = vmatpush1.bf16.msra.mxu0 %v637
    %904 = vmatprep.subr.bf16.mxu0 %v640
    %905 = vmatpush1.bf16.msra.mxu0 %v639
    %906 = vmatprep.subr.bf16.mxu0 %v642
    %907 = vmatpush1.bf16.msra.mxu0 %v641
    %908 = vmatprep.subr.bf16.mxu0 %v644
    %909 = vmatpush1.bf16.msra.mxu0 %v643
    %910 = vmatprep.subr.bf16.mxu0 %v646
    %911 = vmatpush1.bf16.msra.mxu0 %v645
    %912 = vmatprep.subr.bf16.mxu0 %v648
    %913 = vmatpush1.bf16.msra.mxu0 %v647
    %914 = vmatprep.subr.bf16.mxu0 %v650
    %915 = vmatpush1.bf16.msra.mxu0 %v649
    %916 = vmatprep.subr.bf16.mxu0 %v652
    %917 = vmatpush1.bf16.msra.mxu0 %v651
    %918 = vmatprep.subr.bf16.mxu0 %v654
    %919 = vmatpush1.bf16.msra.mxu0 %v653
    %920 = vmatprep.mubr.bf16.mxu0 %v194
    %921 = vmatmul.mubr.bf16.gmra.mrb[0].mxu0 %v193
    %v922 = vpop.f32.mrb[0].mxu0
    %v923 = vadd.f32 %v882, %v922
    %v924 = vpop.f32.mrb[0].mxu0
    %v925 = vadd.f32 %v884, %v924
    %v926 = vpop.f32.mrb[0].mxu0
    %v927 = vpop.f32.mrb[0].mxu0
    %928 = vdwg.mxu0
    %929 = vmatprep.subr.bf16.mxu0 %v656
    %930 = vmatpush1.bf16.msra.mxu0 %v655
    %931 = vmatprep.subr.bf16.mxu0 %v658
    %932 = vmatpush1.bf16.msra.mxu0 %v657
    %933 = vmatprep.subr.bf16.mxu0 %v660
    %934 = vmatpush1.bf16.msra.mxu0 %v659
    %935 = vmatprep.subr.bf16.mxu0 %v662
    %936 = vmatpush1.bf16.msra.mxu0 %v661
    %937 = vmatprep.subr.bf16.mxu0 %v664
    %938 = vmatpush1.bf16.msra.mxu0 %v663
    %939 = vmatprep.subr.bf16.mxu0 %v666
    %940 = vmatpush1.bf16.msra.mxu0 %v665
    %941 = vmatprep.subr.bf16.mxu0 %v668
    %942 = vmatpush1.bf16.msra.mxu0 %v667
    %943 = vmatprep.subr.bf16.mxu0 %v670
    %944 = vmatpush1.bf16.msra.mxu0 %v669
    %945 = vmatprep.subr.bf16.mxu0 %v672
    %946 = vmatpush1.bf16.msra.mxu0 %v671
    %947 = vmatprep.subr.bf16.mxu0 %v674
    %948 = vmatpush1.bf16.msra.mxu0 %v673
    %949 = vmatprep.subr.bf16.mxu0 %v676
    %950 = vmatpush1.bf16.msra.mxu0 %v675
    %951 = vmatprep.subr.bf16.mxu0 %v678
    %952 = vmatpush1.bf16.msra.mxu0 %v677
    %953 = vmatprep.subr.bf16.mxu0 %v680
    %954 = vmatpush1.bf16.msra.mxu0 %v679
    %955 = vmatprep.subr.bf16.mxu0 %v682
    %956 = vmatpush1.bf16.msra.mxu0 %v681
    %957 = vmatprep.subr.bf16.mxu0 %v684
    %958 = vmatpush1.bf16.msra.mxu0 %v683
    %959 = vmatprep.subr.bf16.mxu0 %v686
    %960 = vmatpush1.bf16.msra.mxu0 %v685
    %961 = vmatprep.mubr.bf16.mxu0 %v196
    %962 = vmatmul.mubr.bf16.gmra.mrb[0].mxu0 %v195
    %v963 = vpop.f32.mrb[0].mxu0
    %v964 = vadd.f32 %v923, %v963
    %v965 = vpop.f32.mrb[0].mxu0
    %v966 = vadd.f32 %v925, %v965
    %v967 = vpop.f32.mrb[0].mxu0
    %v968 = vpop.f32.mrb[0].mxu0
    %969 = vdwg.mxu0
    %970 = vmatprep.subr.bf16.mxu0 %v688
    %971 = vmatpush1.bf16.msra.mxu0 %v687
    %972 = vmatprep.subr.bf16.mxu0 %v690
    %973 = vmatpush1.bf16.msra.mxu0 %v689
    %974 = vmatprep.subr.bf16.mxu0 %v692
    %975 = vmatpush1.bf16.msra.mxu0 %v691
    %976 = vmatprep.subr.bf16.mxu0 %v694
    %977 = vmatpush1.bf16.msra.mxu0 %v693
    %978 = vmatprep.subr.bf16.mxu0 %v696
    %979 = vmatpush1.bf16.msra.mxu0 %v695
    %980 = vmatprep.subr.bf16.mxu0 %v698
    %981 = vmatpush1.bf16.msra.mxu0 %v697
    %982 = vmatprep.subr.bf16.mxu0 %v700
    %983 = vmatpush1.bf16.msra.mxu0 %v699
    %984 = vmatprep.subr.bf16.mxu0 %v702
    %985 = vmatpush1.bf16.msra.mxu0 %v701
    %986 = vmatprep.subr.bf16.mxu0 %v704
    %987 = vmatpush1.bf16.msra.mxu0 %v703
    %988 = vmatprep.subr.bf16.mxu0 %v706
    %989 = vmatpush1.bf16.msra.mxu0 %v705
    %990 = vmatprep.subr.bf16.mxu0 %v708
    %991 = vmatpush1.bf16.msra.mxu0 %v707
    %992 = vmatprep.subr.bf16.mxu0 %v710
    %993 = vmatpush1.bf16.msra.mxu0 %v709
    %994 = vmatprep.subr.bf16.mxu0 %v712
    %995 = vmatpush1.bf16.msra.mxu0 %v711
    %996 = vmatprep.subr.bf16.mxu0 %v714
    %997 = vmatpush1.bf16.msra.mxu0 %v713
    %998 = vmatprep.subr.bf16.mxu0 %v716
    %999 = vmatpush1.bf16.msra.mxu0 %v715
    %1000 = vmatprep.subr.bf16.mxu0 %v718
    %1001 = vmatpush1.bf16.msra.mxu0 %v717
    %1002 = vmatprep.mubr.bf16.mxu0 %v198
    %1003 = vmatmul.mubr.bf16.gmra.mrb[0].mxu0 %v197
    %v1004 = vpop.f32.mrb[0].mxu0
    %v1005 = vadd.f32 %v964, %v1004
    %v1006 = vpop.f32.mrb[0].mxu0
    %v1007 = vadd.f32 %v966, %v1006
    %v1008 = vpop.f32.mrb[0].mxu0
    %v1009 = vpop.f32.mrb[0].mxu0
    %1010 = vdwg.mxu0
    %v1011 = vmax.f32 %v1005, 0.0
    %v1012 = vmax.f32 %v1007, 0.0
    %v1013 = vpack.c.bf16 %v1011, %v1011
    %v1014 = vpack.c.bf16 %v1012, %v1012
    %v1015 = vld [vmem:[%s3] sm:$0xf]
    %v1016 = vld [vmem:[%s3 + $0x4] sm:$0xf]
    %v1017 = vld [vmem:[%s3 + $0x8] sm:$0xf]
    %v1018 = vld [vmem:[%s3 + $0xc] sm:$0xf]
    %v1019 = vld [vmem:[%s3 + $0x10] sm:$0xf]
    %v1020 = vld [vmem:[%s3 + $0x14] sm:$0xf]
    %v1021 = vld [vmem:[%s3 + $0x18] sm:$0xf]
    %v1022 = vld [vmem:[%s3 + $0x1c] sm:$0xf]
    %v1023 = vld [vmem:[%s3 + $0x20] sm:$0xf]
    %v1024 = vld [vmem:[%s3 + $0x24] sm:$0xf]
    %v1025 = vld [vmem:[%s3 + $0x28] sm:$0xf]
    %v1026 = vld [vmem:[%s3 + $0x2c] sm:$0xf]
    %v1027 = vld [vmem:[%s3 + $0x30] sm:$0xf]
    %v1028 = vld [vmem:[%s3 + $0x34] sm:$0xf]
    %v1029 = vld [vmem:[%s3 + $0x38] sm:$0xf]
    %v1030 = vld [vmem:[%s3 + $0x3c] sm:$0xf]
    %v1031 = vld [vmem:[%s3 + $0x40] sm:$0xf]
    %v1032 = vld [vmem:[%s3 + $0x44] sm:$0xf]
    %v1033 = vld [vmem:[%s3 + $0x48] sm:$0xf]
    %v1034 = vld [vmem:[%s3 + $0x4c] sm:$0xf]
    %v1035 = vld [vmem:[%s3 + $0x50] sm:$0xf]
    %v1036 = vld [vmem:[%s3 + $0x54] sm:$0xf]
    %v1037 = vld [vmem:[%s3 + $0x58] sm:$0xf]
    %v1038 = vld [vmem:[%s3 + $0x5c] sm:$0xf]
    %v1039 = vld [vmem:[%s3 + $0x60] sm:$0xf]
    %v1040 = vld [vmem:[%s3 + $0x64] sm:$0xf]
    %v1041 = vld [vmem:[%s3 + $0x68] sm:$0xf]
    %v1042 = vld [vmem:[%s3 + $0x6c] sm:$0xf]
    %v1043 = vld [vmem:[%s3 + $0x70] sm:$0xf]
    %v1044 = vld [vmem:[%s3 + $0x74] sm:$0xf]
    %v1045 = vld [vmem:[%s3 + $0x78] sm:$0xf]
    %v1046 = vld [vmem:[%s3 + $0x7c] sm:$0xf]
    %v1047 = vld [vmem:[%s4] sm:$0x1]
    %v1049 = vlaneseq
    %v1050 = vshrl.u32 %v1049, 7
    %v1051 = vsub.s32 0, %v1050
    %v1052 = vrot.slane %v1047, %v1051
    %v1086 = vunpack.c.l.b16 %v1015
    %v1087 = vunpack.c.l.b16 %v1016
    %v1088 = vunpack.c.l.b16 %v1017
    %v1089 = vunpack.c.l.b16 %v1018
    %v1090 = vunpack.c.l.b16 %v1019
    %v1091 = vunpack.c.l.b16 %v1020
    %v1092 = vunpack.c.l.b16 %v1021
    %v1093 = vunpack.c.l.b16 %v1022
    %v1094 = vunpack.c.l.b16 %v1023
    %v1095 = vunpack.c.l.b16 %v1024
    %v1096 = vunpack.c.l.b16 %v1025
    %v1097 = vunpack.c.l.b16 %v1026
    %v1098 = vunpack.c.l.b16 %v1027
    %v1099 = vunpack.c.l.b16 %v1028
    %v1100 = vunpack.c.l.b16 %v1029
    %v1101 = vunpack.c.l.b16 %v1030
    %v1102 = vunpack.c.l.b16 %v1031
    %v1103 = vunpack.c.l.b16 %v1032
    %v1104 = vunpack.c.l.b16 %v1033
    %v1105 = vunpack.c.l.b16 %v1034
    %v1106 = vunpack.c.l.b16 %v1035
    %v1107 = vunpack.c.l.b16 %v1036
    %v1108 = vunpack.c.l.b16 %v1037
    %v1109 = vunpack.c.l.b16 %v1038
    %v1110 = vunpack.c.l.b16 %v1039
    %v1111 = vunpack.c.l.b16 %v1040
    %v1112 = vunpack.c.l.b16 %v1041
    %v1113 = vunpack.c.l.b16 %v1042
    %v1114 = vunpack.c.l.b16 %v1043
    %v1115 = vunpack.c.l.b16 %v1044
    %v1116 = vunpack.c.l.b16 %v1045
    %v1117 = vunpack.c.l.b16 %v1046
    %v1118 = vpack.c.b16 %v1087, %v1086
    %v1119 = vpack.c.b16 %v1089, %v1088
    %v1120 = vpack.c.b16 %v1091, %v1090
    %v1121 = vpack.c.b16 %v1093, %v1092
    %v1122 = vpack.c.b16 %v1095, %v1094
    %v1123 = vpack.c.b16 %v1097, %v1096
    %v1124 = vpack.c.b16 %v1099, %v1098
    %v1125 = vpack.c.b16 %v1101, %v1100
    %v1126 = vpack.c.b16 %v1103, %v1102
    %v1127 = vpack.c.b16 %v1105, %v1104
    %v1128 = vpack.c.b16 %v1107, %v1106
    %v1129 = vpack.c.b16 %v1109, %v1108
    %v1130 = vpack.c.b16 %v1111, %v1110
    %v1131 = vpack.c.b16 %v1113, %v1112
    %v1132 = vpack.c.b16 %v1115, %v1114
    %v1133 = vpack.c.b16 %v1117, %v1116
    %1150 = vmatprep.subr.bf16.mxu0 0
    %1151 = vmatpush1.bf16.msra.mxu0 %v1118
    %1152 = vmatprep.subr.bf16.mxu0 0
    %1153 = vmatpush1.bf16.msra.mxu0 %v1119
    %1154 = vmatprep.subr.bf16.mxu0 0
    %1155 = vmatpush1.bf16.msra.mxu0 %v1120
    %1156 = vmatprep.subr.bf16.mxu0 0
    %1157 = vmatpush1.bf16.msra.mxu0 %v1121
    %1158 = vmatprep.subr.bf16.mxu0 0
    %1159 = vmatpush1.bf16.msra.mxu0 %v1122
    %1160 = vmatprep.subr.bf16.mxu0 0
    %1161 = vmatpush1.bf16.msra.mxu0 %v1123
    %1162 = vmatprep.subr.bf16.mxu0 0
    %1163 = vmatpush1.bf16.msra.mxu0 %v1124
    %1164 = vmatprep.subr.bf16.mxu0 0
    %1165 = vmatpush1.bf16.msra.mxu0 %v1125
    %1166 = vmatprep.subr.bf16.mxu0 0
    %1167 = vmatpush1.bf16.msra.mxu0 %v1126
    %1168 = vmatprep.subr.bf16.mxu0 0
    %1169 = vmatpush1.bf16.msra.mxu0 %v1127
    %1170 = vmatprep.subr.bf16.mxu0 0
    %1171 = vmatpush1.bf16.msra.mxu0 %v1128
    %1172 = vmatprep.subr.bf16.mxu0 0
    %1173 = vmatpush1.bf16.msra.mxu0 %v1129
    %1174 = vmatprep.subr.bf16.mxu0 0
    %1175 = vmatpush1.bf16.msra.mxu0 %v1130
    %1176 = vmatprep.subr.bf16.mxu0 0
    %1177 = vmatpush1.bf16.msra.mxu0 %v1131
    %1178 = vmatprep.subr.bf16.mxu0 0
    %1179 = vmatpush1.bf16.msra.mxu0 %v1132
    %1180 = vmatprep.subr.bf16.mxu0 0
    %1181 = vmatpush1.bf16.msra.mxu0 %v1133
    %1182 = vmatprep.mubr.bf16.mxu0 %v1014
    %1183 = vmatmul.mubr.bf16.gmra.mrb[0].mxu0 %v1013
    %v1184 = vpop.f32.mrb[0].mxu0
    %v1185 = vadd.f32 %v1052, %v1184
    %v1186 = vpop.f32.mrb[0].mxu0
    %v1187 = vpop.f32.mrb[0].mxu0
    %v1188 = vpop.f32.mrb[0].mxu0
    %1189 = vdwg.mxu0
    %v1190 = vxor.u32 %v1185, 2147483648
    %v1191 = vmul.f32 %v1190, 1.442695
    %v1192 = vpow.pop %v1191
    %v1193 = vadd.f32 %v1192, 1.0
    %v1194 = vrcp.pop %v1193
    %v1195 = vmul.f32 1.0, %v1194
    %v1196 = vsub.f32 1.0, %v1195
    %v1197 = vmax.f32 %v1195, %v1196
    %1199 = vrot.lane.b32.xlu0 %v1197, 2
    %v1200 = vpop.permute.xlu0 %1199
    %vm1202 = vcmp.gt.f32.partialorder %v1197, %v1200
    %1204 = vrot.lane.b32.xlu0 %v1195, 2
    %v1205 = vpop.permute.xlu0 %1204
    %v1207 = vsel %vm1202, %v1195, %v1205
    %v1208 = vmax.f32 %v1197, %v1200
    %1210 = vrot.lane.b32.xlu0 %v1208, 2
    %v1211 = vpop.permute.xlu0 %1210
    %vm1213 = vcmp.gt.f32.partialorder %v1197, %v1211
    %1215 = vrot.lane.b32.xlu0 %v1207, 2
    %v1216 = vpop.permute.xlu0 %1215
    %v1218 = vsel %vm1213, %v1195, %v1216
    %v1219 = vmax.f32 %v1197, %v1211
    %1221 = vrot.lane.b32.xlu0 %v1219, 2
    %v1222 = vpop.permute.xlu0 %1221
    %vm1224 = vcmp.gt.f32.partialorder %v1197, %v1222
    %1226 = vrot.lane.b32.xlu0 %v1218, 2
    %v1227 = vpop.permute.xlu0 %1226
    %v1229 = vsel %vm1224, %v1195, %v1227
    %v1230 = vmax.f32 %v1197, %v1222
    %1232 = vrot.lane.b32.xlu0 %v1230, 2
    %v1233 = vpop.permute.xlu0 %1232
    %vm1235 = vcmp.gt.f32.partialorder %v1197, %v1233
    %1237 = vrot.lane.b32.xlu0 %v1229, 2
    %v1238 = vpop.permute.xlu0 %1237
    %v1240 = vsel %vm1235, %v1195, %v1238
    %v1241 = vlaneseq
    %v1242 = vand.u32 %v1241, 127
    %1244 = vset.pattern.permute.xlu0 8
    %1245 = vperm.xlu0 %1244, %v1240
    %v1246 = vpop.permute.xlu0 %1245
    %vm1248 = vcmp.eq.s32.totalorder %v1242, 0
    %v1249 = vsel %vm1248, %v1246, 0.0
    %1250 = vset.pattern.permute.xlu0 9
    %1251 = vperm.xlu0 %1250, %v1240
    %v1252 = vpop.permute.xlu0 %1251
    %vm1254 = vcmp.eq.s32.totalorder %v1242, 1
    %v1255 = vsel %vm1254, %v1252, %v1249
    %1256 = vst [vmem:[%s5] sm:$0xff] %v1255
    // Predicated region
    $region26: #{voting_net_forward.1} parent=1 // pred_check
      _
    $region27: #{voting_net_forward.1} parent=1 // pred_check_branch
      %1258 = sbr.rel (0) target = $region29
    $region28: #{voting_net_forward.1} parent=1 // pred_region
      _
    $region29: #{voting_net_forward.1} parent=1 // pred_fallthru
      _
    // Predicated region
    $region30: #{voting_net_forward.1} parent=1 // pred_check
      _
    $region31: #{voting_net_forward.1} parent=1 // pred_check_branch
      %1260 = sbr.rel (0) target = $region33
    $region32: #{voting_net_forward.1} parent=1 // pred_region
      _
    $region33: #{voting_net_forward.1} parent=1 // pred_fallthru
      _
    %1261 = vsyncpa [#allocation3], 1

</llo_original>
